<compile_context>
chip_gen: v7x
topology: tpu7x:2x2x1
jax: 0.10.0
libtpu: 0.0.40
codegen_flags: <defaults>
</compile_context>

<pallas_src>
import jax
import jax.numpy as jnp
from jax.experimental import pallas as pl
from jax.experimental.pallas import tpu as pltpu


def _vq_kernel(x_ref, ea_ref, et_ref, q_ref, idx_ref, sse_ref, xa_ref):
    """Quantizes one lane-dense tile of TN pixels of one batch item.

    Transposed layout (channels in sublanes, pixels in lanes):
      x_ref   : (1, D, TN)   input tile (slice of NCHW viewed as (B, D, H*W))
      ea_ref  : (K, D+1)     augmented codebook [-2*e | ||e||^2]  (resident)
      et_ref  : (D, K)       codebook transposed                   (resident)
      q_ref   : (1, D, TN)   quantized output tile (caller dtype)
      idx_ref : (1, 1, TN)   int32 nearest-code indices (lane-dense)
      sse_ref : (1, 1, 1)    per-tile partial sum of squared error
      xa_ref  : (D+1, TN)    VMEM scratch for the ones-augmented x tile
    """
    x = x_ref[0].astype(jnp.float32)                 # (D, TN)
    d, tn = x.shape
    k = ea_ref.shape[0]

    # Build [x ; 1] so that ea_aug @ x_aug = ||e||^2 - 2 e.x in ONE MXU pass.
    xa_ref[pl.ds(0, d), :] = x
    xa_ref[pl.ds(d, 1), :] = jnp.ones((1, tn), jnp.float32)

    # Distance for argmin: ||e||^2 - 2 e.x   (||x||^2 is a per-pixel constant).
    dist = jnp.dot(ea_ref[...], xa_ref[...],
                   preferred_element_type=jnp.float32)            # (K, TN)

    # First-minimum argmin over the code (sublane) axis, matching torch.argmin.
    min_val = jnp.min(dist, axis=0, keepdims=True)                # (1, TN)
    code_ids = jax.lax.broadcasted_iota(jnp.int32, (k, tn), 0)    # (K, TN)
    idx = jnp.min(jnp.where(dist <= min_val, code_ids, k),
                  axis=0, keepdims=True)                          # (1, TN) int32
    idx_ref[...] = idx[None]

    # One-hot kept in-register only; quantized values via exact MXU row gather.
    onehot = (code_ids == idx).astype(jnp.float32)                # (K, TN)
    q = jnp.dot(et_ref[...].astype(jnp.float32), onehot,
                preferred_element_type=jnp.float32)               # (D, TN)
    q_ref[...] = q[None].astype(q_ref.dtype)

    # ||x - e||^2 = ||x||^2 + (||e||^2 - 2 e.x) = x^2 + min_val, summed per tile.
    sse = jnp.sum(x * x, keepdims=True) + jnp.sum(min_val, keepdims=True)  # (1,1)
    sse_ref[...] = sse[None]                                      # (1, 1, 1)


def _vmem_estimate(tile_n, K, D, x_bytes, q_bytes):
    """Conservative per-call VMEM footprint (bytes), incl. intermediates."""
    dbl = 2  # default double-buffering of pipelined blocks
    io = dbl * (D * tile_n * x_bytes          # x tile
                + D * tile_n * q_bytes        # q tile
                + tile_n * 4                  # idx tile
                + 4)                          # sse tile
    codebook = dbl * (K * (D + 1) + D * K) * 4
    scratch = ((D + 1 + 7) // 8 * 8) * tile_n * 4                 # xa (padded)
    interm = 4 * K * tile_n * 4 + 4 * tile_n * 4                  # dist/iota/onehot/where
    return io + codebook + scratch + interm + (2 << 20)           # Mosaic slack


def _pick_tile_n(HW, K, D, x_bytes, q_bytes, budget, max_tile=2048):
    cands = [t for t in range(128, min(HW, max_tile) + 1, 128) if HW % t == 0]
    if not cands:
        # TODO(synk): pad HW to a multiple of 128 (with in-kernel masking of
        # the tail) instead of one full-width tile when HW is large and not
        # 128-divisible; fine for typical image sizes.
        return HW
    for t in sorted(cands, reverse=True):
        if _vmem_estimate(t, K, D, x_bytes, q_bytes) <= budget:
            return t
    # TODO(synk): for very large codebooks (K >= 4096) stream over K-chunks
    # with a running min/argmin instead of materializing (K, TN) intermediates.
    return cands[0]


def vector_quantizer_forward(x_nchw, embedding, commitment_cost, *, max_tile_n=2048):
    """Pallas implementation of VectorQuantizer.forward.

    x_nchw    : (B, C, H, W), C == embedding_dim (any float dtype)
    embedding : (K, D) codebook weights
    Returns (loss, quantized_nchw, perplexity, encodings) matching PyTorch.
    """
    B, C, H, W = x_nchw.shape
    K, D = embedding.shape
    assert C == D, "channel dim must equal embedding_dim"
    HW = H * W
    N = B * HW

    # NCHW viewed as (B, D, H*W) is already lane-dense (pixels on lanes);
    # keep the caller's dtype at the HBM boundary (no f32 round-trips).
    x_bdn = x_nchw.reshape(B, D, HW)

    e = embedding.astype(jnp.float32)                        # (K, D)
    e2 = jnp.sum(e * e, axis=1, keepdims=True)               # (K, 1)
    e_aug = jnp.concatenate([-2.0 * e, e2], axis=1)          # (K, D+1)
    e_t = e.T                                                # (D, K)

    # VMEM budget: ~70% of physical capacity, clamped to stay v7x-safe even
    # if the query fails (64 MiB assumption -> ~45 MiB budget).
    try:
        phys_vmem = int(pltpu.get_tpu_info().vmem_capacity_bytes)
    except Exception:
        phys_vmem = 64 << 20
    budget = max(32 << 20, min(int(phys_vmem * 0.7), 96 << 20))

    x_bytes = jnp.dtype(x_nchw.dtype).itemsize
    tile_n = _pick_tile_n(HW, K, D, x_bytes, x_bytes, budget, max_tile=max_tile_n)
    T = HW // tile_n
    G = B * T
    vmem_limit = int(budget)

    grid = (B, T)
    q_bdn, idx_b1n, sse_part = pl.pallas_call(
        _vq_kernel,
        out_shape=(
            jax.ShapeDtypeStruct((B, D, HW), x_nchw.dtype),   # quantized (B,D,H*W)
            jax.ShapeDtypeStruct((B, 1, HW), jnp.int32),      # code indices
            jax.ShapeDtypeStruct((G, 1, 1), jnp.float32),     # partial SSE
        ),
        grid_spec=pltpu.PrefetchScalarGridSpec(
            num_scalar_prefetch=0,
            grid=grid,
            in_specs=[
                pl.BlockSpec((1, D, tile_n), lambda b, t: (b, 0, t)),   # x tile
                pl.BlockSpec((K, D + 1), lambda b, t: (0, 0)),          # [-2e | e2]
                pl.BlockSpec((D, K), lambda b, t: (0, 0)),              # codebook^T
            ],
            out_specs=(
                pl.BlockSpec((1, D, tile_n), lambda b, t: (b, 0, t)),
                pl.BlockSpec((1, 1, tile_n), lambda b, t: (b, 0, t)),
                pl.BlockSpec((1, 1, 1), lambda b, t: (b * T + t, 0, 0)),
            ),
            scratch_shapes=[pltpu.VMEM((D + 1, tile_n), jnp.float32)],
        ),
        compiler_params=pltpu.CompilerParams(
            dimension_semantics=("parallel", "parallel"),
            vmem_limit_bytes=vmem_limit),
    )(x_bdn, e_aug, e_t)

    # Finalize the tiny reductions in plain JAX (keeps the whole grid parallel).
    mse = jnp.sum(sse_part) / jnp.float32(N * D)
    # Forward value: q_latent_loss + commitment_cost * e_latent_loss, both == MSE.
    loss = (1.0 + commitment_cost) * mse

    # Straight-through estimator: forward value is exactly `quantized`.
    # TODO(synk): detach()/STE only affect the backward pass; a custom_vjp would
    # be needed for training-time gradients (forward is exact).
    quantized = q_bdn.reshape(B, C, H, W)

    # Dense one-hot encodings are part of the module's return value; counts and
    # perplexity are derived from them (matches torch.mean(encodings, dim=0)).
    encodings = jax.nn.one_hot(idx_b1n.reshape(N), K, dtype=jnp.float32)
    avg_probs = jnp.mean(encodings, axis=0)
    perplexity = jnp.exp(-jnp.sum(avg_probs * jnp.log(avg_probs + 1e-10)))

    return loss, quantized, perplexity, encodings


def _reference(x_nchw, embedding, commitment_cost):
    """Pure-JAX reference mirroring the PyTorch forward exactly."""
    B, C, H, W = x_nchw.shape
    K, D = embedding.shape
    x = jnp.transpose(x_nchw, (0, 2, 3, 1))
    flat = x.reshape(-1, D)
    dist = (jnp.sum(flat ** 2, axis=1, keepdims=True)
            + jnp.sum(embedding ** 2, axis=1)
            - 2.0 * flat @ embedding.T)
    idx = jnp.argmin(dist, axis=1)
    enc = jax.nn.one_hot(idx, K, dtype=jnp.float32)
    q = (enc @ embedding).reshape(x.shape)
    mse = jnp.mean((q - x) ** 2)
    loss = (1.0 + commitment_cost) * mse
    avg = jnp.mean(enc, axis=0)
    perp = jnp.exp(-jnp.sum(avg * jnp.log(avg + 1e-10)))
    return loss, jnp.transpose(q, (0, 3, 1, 2)), perp, enc


if __name__ == "__main__":
    # Module hyperparameters (synthetic, deterministic init).
    num_embeddings = 8
    embedding_dim = 4
    commitment_cost = 0.25

    key = jax.random.PRNGKey(0)
    k_emb, k_x = jax.random.split(key)

    # nn.Embedding weight ~ U(-1/K, 1/K), shape (K, D)
    embedding = jax.random.uniform(
        k_emb, (num_embeddings, embedding_dim),
        minval=-1.0 / num_embeddings, maxval=1.0 / num_embeddings,
        dtype=jnp.float32)

    # Input: NCHW with C == embedding_dim
    x = jax.random.normal(k_x, (2, embedding_dim, 16, 16), dtype=jnp.float32)

    loss, quantized, perplexity, encodings = jax.block_until_ready(
        vector_quantizer_forward(x, embedding, commitment_cost))

    # Sanity check against the pure-JAX reference.
    r_loss, r_q, r_perp, r_enc = _reference(x, embedding, commitment_cost)
    assert jnp.allclose(loss, r_loss, atol=1e-5), (loss, r_loss)
    assert jnp.allclose(quantized, r_q, atol=1e-5)
    assert jnp.allclose(perplexity, r_perp, atol=1e-4), (perplexity, r_perp)
    assert jnp.allclose(encodings, r_enc)

    print("KERNEL_OK")
</pallas_src>

<mosaic_0001>
module attributes {stable_mosaic.version = 11 : i64} {
  func.func @_vq_kernel(%arg0: i32, %arg1: i32, %arg2: memref<1x4x256xf32, #tpu.memory_space<vmem>>, %arg3: memref<8x5xf32, #tpu.memory_space<vmem>>, %arg4: memref<4x8xf32, #tpu.memory_space<vmem>>, %arg5: memref<1x4x256xf32, #tpu.memory_space<vmem>>, %arg6: memref<1x1x256xi32, #tpu.memory_space<vmem>>, %arg7: memref<1x1x1xf32, #tpu.memory_space<vmem>>, %arg8: memref<5x256xf32, #tpu.memory_space<vmem>>) attributes {dimension_semantics = [#tpu.dimension_semantics<parallel>, #tpu.dimension_semantics<parallel>], iteration_bounds = array<i64: 2, 1>, scalar_prefetch = 0 : i64, scratch_operands = 1 : i64, tpu.core_type = #tpu.core_type<tc>, window_params = [{transform_indices = @transform_0, window_bounds = array<i64: 1, 4, 256>}, {pipeline_mode = #tpu.pipeline_mode<synchronous>, transform_indices = @transform_1, window_bounds = array<i64: 8, 5>}, {pipeline_mode = #tpu.pipeline_mode<synchronous>, transform_indices = @transform_2, window_bounds = array<i64: 4, 8>}, {transform_indices = @transform_3, window_bounds = array<i64: 1, 4, 256>}, {transform_indices = @transform_4, window_bounds = array<i64: 1, 1, 256>}, {transform_indices = @transform_5, window_bounds = array<i64: 1, 1, 1>}]} {
    %c0 = arith.constant 0 : index
    %c0_0 = arith.constant 0 : index
    %c0_1 = arith.constant 0 : index
    %0 = vector.load %arg2[%c0, %c0_0, %c0_1] : memref<1x4x256xf32, #tpu.memory_space<vmem>>, vector<1x4x256xf32>
    %1 = vector.shape_cast %0 : vector<1x4x256xf32> to vector<4x256xf32>
    %c0_2 = arith.constant 0 : index
    %c0_3 = arith.constant 0 : index
    %2 = vector.load %arg8[%c0_2, %c0_3] : memref<5x256xf32, #tpu.memory_space<vmem>>, vector<4x256xf32>
    tpu.vector_store %arg8[%c0_2, %c0_3], %1 {strides = array<i32>} : memref<5x256xf32, #tpu.memory_space<vmem>>, vector<4x256xf32>,
    %cst = arith.constant 1.000000e+00 : f32
    %3 = vector.broadcast %cst : f32 to vector<1x256xf32>
    %c4 = arith.constant 4 : index
    %c0_4 = arith.constant 0 : index
    %4 = vector.load %arg8[%c4, %c0_4] : memref<5x256xf32, #tpu.memory_space<vmem>>, vector<1x256xf32>
    tpu.vector_store %arg8[%c4, %c0_4], %3 {strides = array<i32>} : memref<5x256xf32, #tpu.memory_space<vmem>>, vector<1x256xf32>,
    %c0_5 = arith.constant 0 : index
    %c0_6 = arith.constant 0 : index
    %5 = vector.load %arg3[%c0_5, %c0_6] : memref<8x5xf32, #tpu.memory_space<vmem>>, vector<8x5xf32>
    %c0_7 = arith.constant 0 : index
    %c0_8 = arith.constant 0 : index
    %6 = vector.load %arg8[%c0_7, %c0_8] : memref<5x256xf32, #tpu.memory_space<vmem>>, vector<5x256xf32>
    %cst_9 = arith.constant dense<0.000000e+00> : vector<8x256xf32>
    %7 = tpu.matmul %5, %6, %cst_9 {dimension_numbers = #tpu.dot_dimension_numbers<[1], [0], [0], [1], [0, 0, 1, 1], [], []>} : vector<8x5xf32>, vector<5x256xf32>, vector<8x256xf32> -> vector<8x256xf32>
    %cst_10 = arith.constant dense<0x7F800000> : vector<256xf32>
    %8 = vector.multi_reduction <minimumf>, %7, %cst_10 [0] : vector<8x256xf32> to vector<256xf32>
    %9 = vector.shape_cast %8 : vector<256xf32> to vector<1x256xf32>
    %10 = tpu.iota {dimensions = array<i32: 0>} : vector<8x256xi32>
    %11 = vector.broadcast %9 : vector<1x256xf32> to vector<8x256xf32>
    %12 = arith.cmpf ole, %7, %11 : vector<8x256xf32>
    %c8_i32 = arith.constant 8 : i32
    %13 = vector.broadcast %c8_i32 : i32 to vector<8x256xi32>
    %14 = arith.select %12, %10, %13 : vector<8x256xi1>, vector<8x256xi32>
    %cst_11 = arith.constant dense<2147483647> : vector<256xi32>
    %15 = vector.multi_reduction <minsi>, %14, %cst_11 [0] : vector<8x256xi32> to vector<256xi32>
    %16 = vector.shape_cast %15 : vector<256xi32> to vector<1x256xi32>
    %17 = vector.shape_cast %16 : vector<1x256xi32> to vector<1x1x256xi32>
    %c0_12 = arith.constant 0 : index
    %c0_13 = arith.constant 0 : index
    %c0_14 = arith.constant 0 : index
    %18 = vector.load %arg6[%c0_12, %c0_13, %c0_14] : memref<1x1x256xi32, #tpu.memory_space<vmem>>, vector<1x1x256xi32>
    tpu.vector_store %arg6[%c0_12, %c0_13, %c0_14], %17 {strides = array<i32>} : memref<1x1x256xi32, #tpu.memory_space<vmem>>, vector<1x1x256xi32>,
    %19 = vector.broadcast %16 : vector<1x256xi32> to vector<8x256xi32>
    %20 = arith.cmpi eq, %10, %19 : vector<8x256xi32>
    %21 = arith.extui %20 : vector<8x256xi1> to vector<8x256xi32>
    %22 = arith.sitofp %21 : vector<8x256xi32> to vector<8x256xf32>
    %c0_15 = arith.constant 0 : index
    %c0_16 = arith.constant 0 : index
    %23 = vector.load %arg4[%c0_15, %c0_16] : memref<4x8xf32, #tpu.memory_space<vmem>>, vector<4x8xf32>
    %cst_17 = arith.constant dense<0.000000e+00> : vector<4x256xf32>
    %24 = tpu.matmul %23, %22, %cst_17 {dimension_numbers = #tpu.dot_dimension_numbers<[1], [0], [0], [1], [0, 0, 1, 1], [], []>} : vector<4x8xf32>, vector<8x256xf32>, vector<4x256xf32> -> vector<4x256xf32>
    %25 = vector.shape_cast %24 : vector<4x256xf32> to vector<1x4x256xf32>
    %c0_18 = arith.constant 0 : index
    %c0_19 = arith.constant 0 : index
    %c0_20 = arith.constant 0 : index
    %26 = vector.load %arg5[%c0_18, %c0_19, %c0_20] : memref<1x4x256xf32, #tpu.memory_space<vmem>>, vector<1x4x256xf32>
    tpu.vector_store %arg5[%c0_18, %c0_19, %c0_20], %25 {strides = array<i32>} : memref<1x4x256xf32, #tpu.memory_space<vmem>>, vector<1x4x256xf32>,
    %27 = arith.mulf %1, %1 : vector<4x256xf32>
    %28 = vector.shape_cast %27 : vector<4x256xf32> to vector<1x4x256xf32>
    %cst_21 = arith.constant dense<0.000000e+00> : vector<1xf32>
    %29 = vector.multi_reduction <add>, %28, %cst_21 [1, 2] : vector<1x4x256xf32> to vector<1xf32>
    %30 = vector.shape_cast %29 : vector<1xf32> to vector<1x1x1xf32>
    %31 = vector.extract %30[0, 0, 0] : f32 from vector<1x1x1xf32>
    %32 = vector.broadcast %31 : f32 to vector<1x1xf32>
    %33 = vector.shape_cast %9 : vector<1x256xf32> to vector<1x1x256xf32>
    %cst_22 = arith.constant dense<0.000000e+00> : vector<1xf32>
    %34 = vector.multi_reduction <add>, %33, %cst_22 [1, 2] : vector<1x1x256xf32> to vector<1xf32>
    %35 = vector.shape_cast %34 : vector<1xf32> to vector<1x1x1xf32>
    %36 = vector.extract %35[0, 0, 0] : f32 from vector<1x1x1xf32>
    %37 = vector.broadcast %36 : f32 to vector<1x1xf32>
    %38 = arith.addf %32, %37 : vector<1x1xf32>
    %39 = vector.shape_cast %38 : vector<1x1xf32> to vector<1x1x1xf32>
    %c0_23 = arith.constant 0 : index
    %c0_24 = arith.constant 0 : index
    %c0_25 = arith.constant 0 : index
    %40 = vector.load %arg7[%c0_23, %c0_24, %c0_25] : memref<1x1x1xf32, #tpu.memory_space<vmem>>, vector<1x1x1xf32>
    tpu.vector_store %arg7[%c0_23, %c0_24, %c0_25], %39 {strides = array<i32>} : memref<1x1x1xf32, #tpu.memory_space<vmem>>, vector<1x1x1xf32>,
    return
  }
  func.func @transform_0(%arg0: i32, %arg1: i32) -> (i32, i32, i32) {
    %c0_i32 = arith.constant 0 : i32
    %c0_i32_0 = arith.constant 0 : i32
    return %arg0, %c0_i32, %arg1 : i32, i32, i32
  }
  func.func @transform_1(%arg0: i32, %arg1: i32) -> (i32, i32) {
    %c0_i32 = arith.constant 0 : i32
    %c0_i32_0 = arith.constant 0 : i32
    %c0_i32_1 = arith.constant 0 : i32
    return %c0_i32, %c0_i32_0 : i32, i32
  }
  func.func @transform_2(%arg0: i32, %arg1: i32) -> (i32, i32) {
    %c0_i32 = arith.constant 0 : i32
    %c0_i32_0 = arith.constant 0 : i32
    %c0_i32_1 = arith.constant 0 : i32
    return %c0_i32, %c0_i32_0 : i32, i32
  }
  func.func @transform_3(%arg0: i32, %arg1: i32) -> (i32, i32, i32) {
    %c0_i32 = arith.constant 0 : i32
    %c0_i32_0 = arith.constant 0 : i32
    return %arg0, %c0_i32, %arg1 : i32, i32, i32
  }
  func.func @transform_4(%arg0: i32, %arg1: i32) -> (i32, i32, i32) {
    %c0_i32 = arith.constant 0 : i32
    %c0_i32_0 = arith.constant 0 : i32
    return %arg0, %c0_i32, %arg1 : i32, i32, i32
  }
  func.func @transform_5(%arg0: i32, %arg1: i32) -> (i32, i32, i32) {
    %c1_i32 = arith.constant 1 : i32
    %0 = arith.muli %arg0, %c1_i32 : i32
    %1 = arith.addi %0, %arg1 : i32
    %c0_i32 = arith.constant 0 : i32
    %c0_i32_0 = arith.constant 0 : i32
    %c0_i32_1 = arith.constant 0 : i32
    return %1, %c0_i32, %c0_i32_0 : i32, i32, i32
  }
}

</mosaic_0001>

<llo_original>
// kernel: tpu_custom_call.1
$region0: #{tpu_custom_call.1}
  #allocation0 [shape = 'u32[]', space=smem, size = 0x4, offset = 0x4, fixed_abs, tag = 'smem constant byte address 0x4 - core index']
  #allocation1 [shape = 'u32[144,128]{1,0:T(1,128)}', space=vmem, size = 0x12000, scoped, tag = 'internal scratch']
  #allocation2 [shape = 'f32[5,256]{1,0:T(8,128)}', space=vmem, size = 0x2000, scoped, tag = 'scratch operand']
  %s0 = inlined_call_operand.hbm [shape: f32[2,4,256], index: 0, kind: input, shape index: {}]
  %s1 = inlined_call_operand.hbm [shape: f32[8,5], index: 1, kind: input, shape index: {}]
  %s2 = inlined_call_operand.vmem [shape: f32[4,8], index: 2, kind: input, shape index: {}]
  %s3 = inlined_call_operand.hbm [shape: f32[2,4,256], index: 3, kind: output, shape index: {0}]
  %s4 = inlined_call_operand.hbm [shape: s32[2,1,256], index: 4, kind: output, shape index: {1}]
  %s5 = inlined_call_operand.vmem [shape: f32[2,1,1], index: 5, kind: output, shape index: {2}]
  %6 = xla_tuple %s3, %s4, %s5
  %s7 = sld [smem:[#allocation0]]
  $region69: #{tpu_custom_call.1} parent=0
    _
  %s9 = ssub.s32 1, %s7
  %s10 = scalar_select 0, %s9, %s7
  $region1: #{tpu_custom_call.1} parent=0
    #allocation3 [shape = 'u8[8192]{0}', space=vmem, size = 0x2000, scoped, tag = 'input window, operand 0']
    #allocation4 [shape = 's32[2]{0}', space=sflag, size = 0x8, scoped, tag = 'scoped memory for tpu_custom_call.1']
    #allocation5 [shape = 's32[2]{0}', space=sflag, size = 0x8, scoped, tag = 'scoped memory for tpu_custom_call.1']
    #allocation6 [shape = 'u8[4096]{0}', space=vmem, size = 0x1000, scoped, tag = 'input window, operand 1, single buffered']
    #allocation7 [shape = 's32[1]{0}', space=sflag, size = 0x4, scoped, tag = 'scoped memory for tpu_custom_call.1']
    #allocation8 [shape = 'u8[8192]{0}', space=vmem, size = 0x2000, scoped, tag = 'output window, operand 0']
    #allocation9 [shape = 'u8[2048]{0}', space=vmem, size = 0x800, scoped, tag = 'output window, operand 1']
    #allocation10 [shape = 's32[2]{0}', space=sflag, size = 0x8, scoped, tag = 'scoped memory for tpu_custom_call.1']
    %11 = vsyncpa [#allocation4], 0
    %s12 = scalar_lea.sflag [#allocation4], 1
    %13 = vsyncpa %s12, 0
    %14 = vsyncpa [#allocation7], 0
    %15 = vsyncpa [#allocation5], 0
    %s16 = scalar_lea.sflag [#allocation5], 1
    %17 = vsyncpa %s16, 0
    %18 = vsyncpa [#allocation10], 0
    %s19 = scalar_lea.sflag [#allocation10], 1
    %20 = vsyncpa %s19, 0
    loop: start=0, step=1, limit=4
    $region2: #{tpu_custom_call.1} parent=1 // loop_pre_header
      _
    $region3: #{tpu_custom_call.1} parent=1 // loop_header
      %s22 = sphi 0, %s26
      %p23 = scmp.ge.s32.totalorder %s22, 4
      %s29 = sphi 0, %s41
      %s30 = sphi 0, %s37
      %s31 = sphi 0, %s29
      %s32 = sphi 0, %s30
      %s33 = sphi 0, %s31
      %s34 = sphi 0, %s32
      %s46 = sphi 0, %s48
      %s49 = sphi 0, %s46
      %s50 = sphi 0, %s49
      %s66 = sphi 0, %s50
      %s70 = sphi 0, %s70
      %s72 = sphi 0, %s70
      %s73 = sphi 0, %s72
      %s87 = sphi 0, %s73
      %s91 = sphi 0, %s91
      %s93 = sphi 0, %s91
      %s94 = sphi 0, %s93
      %s108 = sphi 0, %s94
      %s116 = sphi 0, %s118
      %s119 = sphi 0, %s116
      %s120 = sphi 0, %s119
      %s136 = sphi 0, %s120
      %s144 = sphi 0, %s146
      %s147 = sphi 0, %s144
      %s148 = sphi 0, %s147
      %s164 = sphi 0, %s148
      %s172 = sphi 0, %s174
      %s175 = sphi 0, %s172
      %s176 = sphi 0, %s175
      %s192 = sphi 0, %s176
    $region4: #{tpu_custom_call.1} parent=1 // loop_header_branch
      %25 = sbr.rel (%p23) target = $region8
    $region5: #{tpu_custom_call.1} parent=1 // loop_body
      %s27 = ssub.s32 %s22, 1
      %s28 = ssub.s32 %s22, 2
      %s35 = sadd.s32 1, %s30
      %p36 = scmp.ge.s32.totalorder %s35, 1
      %s37 = scalar_select %p36, 0, %s35
      %s38 = sadd.s32 1, %s29
      %s39 = scalar_select %p36, %s38, %s29
      %p40 = scmp.ge.s32.totalorder %s39, 2
      %s41 = scalar_select %p40, 0, %s39
      %s42 = ssub.s32 %s29, %s41
      %s43 = ssub.s32 %s30, %s37
      %s44 = sor.u32 %s42, %s43
      %p45 = scmp.eq.s32.totalorder %s44, 0
      %s47 = sadd.s32 %s46, 1
      %s48 = scalar_select %p45, %s46, %s47
      %p51 = pneg %p45
      %p52 = scmp.eq.s32.totalorder %s22, 1
      %p53 = por %p51, %p52
      %p54 = scmp.ne.s32.totalorder %s46, %s49
      %p55 = scmp.eq.s32.totalorder %s22, 0
      %p56 = por %p54, %p55
      %p57 = scmp.ne.s32.totalorder %s46, %s49
      %p58 = scmp.eq.s32.totalorder %s27, 1
      %p59 = por %p57, %p58
      %p60 = scmp.ne.s32.totalorder %s49, %s50
      %p61 = scmp.eq.s32.totalorder %s27, 0
      %p62 = por %p60, %p61
      %p63 = scmp.ne.s32.totalorder %s49, %s50
      %p64 = scmp.eq.s32.totalorder %s28, 1
      %p65 = por %p63, %p64
      %p67 = scmp.ne.s32.totalorder %s50, %s66
      %p68 = scmp.eq.s32.totalorder %s28, 0
      %p69 = por %p67, %p68
      %s71 = sadd.s32 %s70, 1
      %p74 = scmp.eq.s32.totalorder %s22, 1
      %p75 = scmp.ne.s32.totalorder %s70, %s72
      %p76 = scmp.eq.s32.totalorder %s22, 0
      %p77 = por %p75, %p76
      %p78 = scmp.ne.s32.totalorder %s70, %s72
      %p79 = scmp.eq.s32.totalorder %s27, 1
      %p80 = por %p78, %p79
      %p81 = scmp.ne.s32.totalorder %s72, %s73
      %p82 = scmp.eq.s32.totalorder %s27, 0
      %p83 = por %p81, %p82
      %p84 = scmp.ne.s32.totalorder %s72, %s73
      %p85 = scmp.eq.s32.totalorder %s28, 1
      %p86 = por %p84, %p85
      %p88 = scmp.ne.s32.totalorder %s73, %s87
      %p89 = scmp.eq.s32.totalorder %s28, 0
      %p90 = por %p88, %p89
      %s92 = sadd.s32 %s91, 1
      %p95 = scmp.eq.s32.totalorder %s22, 1
      %p96 = scmp.ne.s32.totalorder %s91, %s93
      %p97 = scmp.eq.s32.totalorder %s22, 0
      %p98 = por %p96, %p97
      %p99 = scmp.ne.s32.totalorder %s91, %s93
      %p100 = scmp.eq.s32.totalorder %s27, 1
      %p101 = por %p99, %p100
      %p102 = scmp.ne.s32.totalorder %s93, %s94
      %p103 = scmp.eq.s32.totalorder %s27, 0
      %p104 = por %p102, %p103
      %p105 = scmp.ne.s32.totalorder %s93, %s94
      %p106 = scmp.eq.s32.totalorder %s28, 1
      %p107 = por %p105, %p106
      %p109 = scmp.ne.s32.totalorder %s94, %s108
      %p110 = scmp.eq.s32.totalorder %s28, 0
      %p111 = por %p109, %p110
      %s112 = ssub.s32 %s29, %s41
      %s113 = ssub.s32 %s30, %s37
      %s114 = sor.u32 %s112, %s113
      %p115 = scmp.eq.s32.totalorder %s114, 0
      %s117 = sadd.s32 %s116, 1
      %s118 = scalar_select %p115, %s116, %s117
      %p121 = pneg %p115
      %p122 = scmp.eq.s32.totalorder %s22, 1
      %p123 = por %p121, %p122
      %p124 = scmp.ne.s32.totalorder %s116, %s119
      %p125 = scmp.eq.s32.totalorder %s22, 0
      %p126 = por %p124, %p125
      %p127 = scmp.ne.s32.totalorder %s116, %s119
      %p128 = scmp.eq.s32.totalorder %s27, 1
      %p129 = por %p127, %p128
      %p130 = scmp.ne.s32.totalorder %s119, %s120
      %p131 = scmp.eq.s32.totalorder %s27, 0
      %p132 = por %p130, %p131
      %p133 = scmp.ne.s32.totalorder %s119, %s120
      %p134 = scmp.eq.s32.totalorder %s28, 1
      %p135 = por %p133, %p134
      %p137 = scmp.ne.s32.totalorder %s120, %s136
      %p138 = scmp.eq.s32.totalorder %s28, 0
      %p139 = por %p137, %p138
      %s140 = ssub.s32 %s29, %s41
      %s141 = ssub.s32 %s30, %s37
      %s142 = sor.u32 %s140, %s141
      %p143 = scmp.eq.s32.totalorder %s142, 0
      %s145 = sadd.s32 %s144, 1
      %s146 = scalar_select %p143, %s144, %s145
      %p149 = pneg %p143
      %p150 = scmp.eq.s32.totalorder %s22, 1
      %p151 = por %p149, %p150
      %p152 = scmp.ne.s32.totalorder %s144, %s147
      %p153 = scmp.eq.s32.totalorder %s22, 0
      %p154 = por %p152, %p153
      %p155 = scmp.ne.s32.totalorder %s144, %s147
      %p156 = scmp.eq.s32.totalorder %s27, 1
      %p157 = por %p155, %p156
      %p158 = scmp.ne.s32.totalorder %s147, %s148
      %p159 = scmp.eq.s32.totalorder %s27, 0
      %p160 = por %p158, %p159
      %p161 = scmp.ne.s32.totalorder %s147, %s148
      %p162 = scmp.eq.s32.totalorder %s28, 1
      %p163 = por %p161, %p162
      %p165 = scmp.ne.s32.totalorder %s148, %s164
      %p166 = scmp.eq.s32.totalorder %s28, 0
      %p167 = por %p165, %p166
      %s168 = sadd.s32 %s29, %s30
      %s169 = sadd.s32 %s41, %s37
      %s170 = ssub.s32 %s168, %s169
      %p171 = scmp.eq.s32.totalorder %s170, 0
      %s173 = sadd.s32 %s172, 1
      %s174 = scalar_select %p171, %s172, %s173
      %p177 = pneg %p171
      %p178 = scmp.eq.s32.totalorder %s22, 1
      %p179 = por %p177, %p178
      %p180 = scmp.ne.s32.totalorder %s172, %s175
      %p181 = scmp.eq.s32.totalorder %s22, 0
      %p182 = por %p180, %p181
      %p183 = scmp.ne.s32.totalorder %s172, %s175
      %p184 = scmp.eq.s32.totalorder %s27, 1
      %p185 = por %p183, %p184
      %p186 = scmp.ne.s32.totalorder %s175, %s176
      %p187 = scmp.eq.s32.totalorder %s27, 0
      %p188 = por %p186, %p187
      %p189 = scmp.ne.s32.totalorder %s175, %s176
      %p190 = scmp.eq.s32.totalorder %s28, 1
      %p191 = por %p189, %p190
      %p193 = scmp.ne.s32.totalorder %s176, %s192
      %p194 = scmp.eq.s32.totalorder %s28, 0
      %p195 = por %p193, %p194
      %p196 = scmp.le.s32.totalorder 1, %s22
      %p197 = scmp.lt.s32.totalorder %s22, 3
      %p198 = pnand %p196, %p197
      %p199 = pneg %p198
      // Predicated region
      $region9: #{tpu_custom_call.1} parent=5 // pred_check
        _
      $region10: #{tpu_custom_call.1} parent=5 // pred_check_branch
        %201 = sbr.rel (%p198) target = $region12
      $region11: #{tpu_custom_call.1} parent=5 // pred_region
        %s202 = ssub.s32 %s22, 1
        // Predicated region
        $region13: #{tpu_custom_call.1} parent=11 // pred_check
          %p203 = pneg %p83
        $region14: #{tpu_custom_call.1} parent=11 // pred_check_branch
          %205 = sbr.rel (%p203) target = $region16
        $region15: #{tpu_custom_call.1} parent=11 // pred_region
          %s207 = ssub.s32 128, 128
          %208 = vsyncadd [#allocation7], %s207
          %s210 = sshll.u32 [#allocation6], 4
          %s211 = int_to_ptr.vmem [resolvable:$true] %s210
          %213 = dma.hbm_to_vmem [thread:$0]  %s1, 128, %s211, [#allocation7]
        $region16: #{tpu_custom_call.1} parent=11 // pred_fallthru
          _
        // Predicated region
        $region17: #{tpu_custom_call.1} parent=11 // pred_check
          %p214 = pneg %p104
        $region18: #{tpu_custom_call.1} parent=11 // pred_check_branch
          %216 = sbr.rel (%p214) target = $region20
        $region19: #{tpu_custom_call.1} parent=11 // pred_region
          _
        $region20: #{tpu_custom_call.1} parent=11 // pred_fallthru
          _
      $region12: #{tpu_custom_call.1} parent=5 // pred_fallthru
        _
      %p217 = scmp.lt.s32.totalorder %s22, 2
      // Predicated region
      $region21: #{tpu_custom_call.1} parent=5 // pred_check
        %p218 = pneg %p217
      $region22: #{tpu_custom_call.1} parent=5 // pred_check_branch
        %220 = sbr.rel (%p218) target = $region24
      $region23: #{tpu_custom_call.1} parent=5 // pred_region
        // Predicated region
        $region25: #{tpu_custom_call.1} parent=23 // pred_check
          %p221 = pneg %p56
        $region26: #{tpu_custom_call.1} parent=23 // pred_check_branch
          %223 = sbr.rel (%p221) target = $region28
        $region27: #{tpu_custom_call.1} parent=23 // pred_region
          %s224 = sand.u32 %s46, 1
          %s225 = scalar_lea.sflag [#allocation4], %s224
          %s226 = sand.u32 %s46, 1
          %s227 = smul.addr %s226, 8
          %s228 = scalar_lea.vmem [#allocation3], %s227
          %s229 = smul.u32 2, %s30
          %s231 = ssub.s32 128, 128
          %232 = vsyncadd %s225, %s231
          %s233 = smul.addr %s29, 2
          %s234 = sadd.s32 %s229, %s233
          %s235 = smul.addr %s234, 64
          %s236 = scalar_lea.hbm %s0, %s235
          %s238 = sshll.u32 %s228, 4
          %s239 = int_to_ptr.vmem [resolvable:$true] %s238
          %241 = dma.hbm_to_vmem [thread:$0]  %s236, 128, %s239, %s225
        $region28: #{tpu_custom_call.1} parent=23 // pred_fallthru
          _
      $region24: #{tpu_custom_call.1} parent=5 // pred_fallthru
        _
      %p242 = scmp.le.s32.totalorder 1, %s22
      %p243 = scmp.lt.s32.totalorder %s22, 3
      %p244 = pnand %p242, %p243
      %p245 = pneg %p244
      // Predicated region
      $region29: #{tpu_custom_call.1} parent=5 // pred_check
        _
      $region30: #{tpu_custom_call.1} parent=5 // pred_check_branch
        %247 = sbr.rel (%p244) target = $region32
      $region31: #{tpu_custom_call.1} parent=5 // pred_region
        %s248 = ssub.s32 %s22, 1
        %s249 = sand.u32 %s49, 1
        %s250 = scalar_lea.sflag [#allocation4], %s249
        %s251 = sand.u32 %s49, 1
        %s252 = smul.addr %s251, 8
        %s253 = scalar_lea.vmem [#allocation3], %s252
        // Predicated region
        $region33: #{tpu_custom_call.1} parent=31 // pred_check
          %p254 = pneg %p62
        $region34: #{tpu_custom_call.1} parent=31 // pred_check_branch
          %256 = sbr.rel (%p254) target = $region36
        $region35: #{tpu_custom_call.1} parent=31 // pred_region
          %257 = dma.done %s250, 128
        $region36: #{tpu_custom_call.1} parent=31 // pred_fallthru
          _
        // Predicated region
        $region37: #{tpu_custom_call.1} parent=31 // pred_check
          %p258 = pneg %p83
        $region38: #{tpu_custom_call.1} parent=31 // pred_check_branch
          %260 = sbr.rel (%p258) target = $region40
        $region39: #{tpu_custom_call.1} parent=31 // pred_region
          %261 = dma.done [#allocation7], 128
        $region40: #{tpu_custom_call.1} parent=31 // pred_fallthru
          _
        %s262 = sand.u32 %s49, 1
        %s263 = scalar_lea.sflag [#allocation4], %s262
        %s264 = sand.u32 %s49, 1
        %s265 = smul.addr %s264, 8
        %s266 = scalar_lea.vmem [#allocation3], %s265
        %p267 = pneg %p62
        %p268 = pneg %p59
        %p269 = pneg %p83
        %p270 = pneg %p80
        %p271 = pneg %p104
        %p272 = pneg %p101
        %p273 = pneg %p132
        %p274 = pneg %p129
        %s275 = sand.u32 %s119, 1
        %s276 = scalar_lea.sflag [#allocation5], %s275
        %s277 = sand.u32 %s119, 1
        %s278 = smul.addr %s277, 8
        %s279 = scalar_lea.vmem [#allocation8], %s278
        %p280 = pneg %p160
        %p281 = pneg %p157
        %s282 = sand.u32 %s147, 1
        %s283 = scalar_lea.sflag [#allocation10], %s282
        %s284 = sand.u32 %s147, 1
        %s285 = smul.addr %s284, 2
        %s286 = scalar_lea.vmem [#allocation9], %s285
        %p287 = pneg %p188
        %p288 = pneg %p185
        %s289 = sadd.s32 %s31, %s32
        %p290 = scmp.lt.s32.totalorder %s289, 1
        %s291 = scalar_select %p290, %s289, 1
        %s292 = scalar_lea.vmem %s5, %s291
        %s293 = smul.u32 2, %s32
        %s294 = smul.u32 2, %s32
        %s295 = smul.u32 2, %s32
        %s296 = sadd.s32 %s31, %s32
        %p297 = scmp.lt.s32.totalorder %s296, 1
        %s298 = scalar_select %p297, %s296, 1
        %s299 = scalar_lea.vmem %s5, %s298
        %s300 = sadd.s32 %s31, %s32
        %v301 = vld [vmem:[%s253] sm:$0xff]
        %v303 = vcombine.high %v301, %v301
        %305 = vst [vmem:[#allocation2] sm:$0xf] %v301
        %306 = vst [vmem:[#allocation2 + $0x8] sm:$0xf] %v303
        %v307 = vlaneseq
        %vm308 = vcmp.ge.s32.totalorder %v307, 0
        %vm309 = vcmp.lt.s32.totalorder %v307, 256
        %vm310 = vmand %vm308, %vm309
        %s311 = scalar_lea.vmem [#allocation2], 4
        %312 = vst.msk [vmem:[%s311] ss:$8 sm:$0x3] %vm310, 1.0
        %313 = vst.msk [vmem:[%s311] ss:$8 sm:$0x0] %vm310, 1.0
        %v314 = vld [vmem:[#allocation6] sm:$0xff]
        %v315 = vld [vmem:[#allocation2] sm:$0x1f]
        %v316 = vld [vmem:[#allocation2 + $0x8] sm:$0x1f]
        %vm317 = vcmask 39936
        %v319 = vsel %vm317, %v314, 0
        %vm321 = vcmask 1044480
        %v323 = vsel %vm321, %v315, 0
        %v326 = vsel %vm321, %v316, 0
        %328 = vmatprep.subr.mxu0 %v326
        %329 = vmatpush1.msra.mxu0 %v323
        %330 = vmatprep.subr.mxu0 0.0
        %331 = vmatpush1.msra.mxu0 0.0
        %332 = vmatprep.subr.mxu0 0.0
        %333 = vmatpush1.msra.mxu0 0.0
        %334 = vmatprep.subr.mxu0 0.0
        %335 = vmatpush1.msra.mxu0 0.0
        %336 = vmatprep.subr.mxu0 0.0
        %337 = vmatpush1.msra.mxu0 0.0
        %338 = vmatprep.subr.mxu0 0.0
        %339 = vmatpush1.msra.mxu0 0.0
        %340 = vmatprep.subr.mxu0 0.0
        %341 = vmatpush1.msra.mxu0 0.0
        %342 = vmatprep.subr.mxu0 0.0
        %343 = vmatpush1.msra.mxu0 0.0
        %344 = vmatprep.subr.mxu0 0.0
        %345 = vmatpush1.msra.mxu0 0.0
        %346 = vmatprep.subr.mxu0 0.0
        %347 = vmatpush1.msra.mxu0 0.0
        %348 = vmatprep.subr.mxu0 0.0
        %349 = vmatpush1.msra.mxu0 0.0
        %350 = vmatprep.subr.mxu0 0.0
        %351 = vmatpush1.msra.mxu0 0.0
        %352 = vmatprep.subr.mxu0 0.0
        %353 = vmatpush1.msra.mxu0 0.0
        %354 = vmatprep.subr.mxu0 0.0
        %355 = vmatpush1.msra.mxu0 0.0
        %356 = vmatprep.subr.mxu0 0.0
        %357 = vmatpush1.msra.mxu0 0.0
        %358 = vmatprep.subr.mxu0 0.0
        %359 = vmatpush1.msra.mxu0 0.0
        %360 = vmatprep.subr.mxu0 0.0
        %361 = vmatpush1.msra.mxu0 0.0
        %362 = vmatprep.subr.mxu0 0.0
        %363 = vmatpush1.msra.mxu0 0.0
        %364 = vmatprep.subr.mxu0 0.0
        %365 = vmatpush1.msra.mxu0 0.0
        %366 = vmatprep.subr.mxu0 0.0
        %367 = vmatpush1.msra.mxu0 0.0
        %368 = vmatprep.subr.mxu0 0.0
        %369 = vmatpush1.msra.mxu0 0.0
        %370 = vmatprep.subr.mxu0 0.0
        %371 = vmatpush1.msra.mxu0 0.0
        %372 = vmatprep.subr.mxu0 0.0
        %373 = vmatpush1.msra.mxu0 0.0
        %374 = vmatprep.subr.mxu0 0.0
        %375 = vmatpush1.msra.mxu0 0.0
        %376 = vmatprep.subr.mxu0 0.0
        %377 = vmatpush1.msra.mxu0 0.0
        %378 = vmatprep.subr.mxu0 0.0
        %379 = vmatpush1.msra.mxu0 0.0
        %380 = vmatprep.subr.mxu0 0.0
        %381 = vmatpush1.msra.mxu0 0.0
        %382 = vmatprep.subr.mxu0 0.0
        %383 = vmatpush1.msra.mxu0 0.0
        %384 = vmatprep.subr.mxu0 0.0
        %385 = vmatpush1.msra.mxu0 0.0
        %386 = vmatprep.subr.mxu0 0.0
        %387 = vmatpush1.msra.mxu0 0.0
        %388 = vmatprep.subr.mxu0 0.0
        %389 = vmatpush1.msra.mxu0 0.0
        %390 = vmatprep.subr.mxu0 0.0
        %391 = vmatpush1.msra.mxu0 0.0
        %392 = vmatprep.mubr.f32.mxu0 0.0
        %393 = vmatmul.mubr.f32.gmra.mrb[0].mxu0 %v319
        %v394 = vpop.f32.mrb[0].mxu0
        %v395 = vadd.f32 0.0, %v394
        %v396 = vpop.f32.mrb[0].mxu0
        %v397 = vadd.f32 0.0, %v396
        %398 = vdwg.mxu0
        %v399 = vrot.slane %v395, 4
        %v400 = vmin.f32 %v395, %v399
        %v401 = vrot.slane %v400, 2
        %v402 = vmin.f32 %v400, %v401
        %v403 = vrot.slane %v402, 1
        %v404 = vmin.f32 %v402, %v403
        %v405 = vrot.slane %v397, 4
        %v406 = vmin.f32 %v397, %v405
        %v407 = vrot.slane %v406, 2
        %v408 = vmin.f32 %v406, %v407
        %v409 = vrot.slane %v408, 1
        %v410 = vmin.f32 %v408, %v409
        %v411 = vlaneseq
        %v412 = vshrl.u32 %v411, 7
        %vm413 = vcmp.le.f32.partialorder %v395, %v404
        %vm414 = vcmp.le.f32.partialorder %v397, %v410
        %v415 = vsel %vm413, %v412, 8
        %v416 = vsel %vm414, %v412, 8
        %v417 = vrot.slane %v415, 4
        %vm418 = vcmp.lt.s32.totalorder %v415, %v417
        %v419 = vsel %vm418, %v415, %v417
        %v420 = vrot.slane %v419, 2
        %vm421 = vcmp.lt.s32.totalorder %v419, %v420
        %v422 = vsel %vm421, %v419, %v420
        %v423 = vrot.slane %v422, 1
        %vm424 = vcmp.lt.s32.totalorder %v422, %v423
        %v425 = vsel %vm424, %v422, %v423
        %v426 = vrot.slane %v416, 4
        %vm427 = vcmp.lt.s32.totalorder %v416, %v426
        %v428 = vsel %vm427, %v416, %v426
        %v429 = vrot.slane %v428, 2
        %vm430 = vcmp.lt.s32.totalorder %v428, %v429
        %v431 = vsel %vm430, %v428, %v429
        %v432 = vrot.slane %v431, 1
        %vm433 = vcmp.lt.s32.totalorder %v431, %v432
        %v434 = vsel %vm433, %v431, %v432
        %v435 = vcombine.low %v425, %v434
        %v437 = vunpack.c.l.s4 1966171168
        %v438 = vunpack.c.0.s8 %v437
        %v439 = vlaneseq
        %v440 = vshrl.u32 %v439, 7
        %v441 = vsub.s32 %v438, %v440
        %v442 = vrot.slane %v435, %v441
        %v444 = vunpack.c.l.s4 1966171168
        %v445 = vunpack.c.0.s8 %v444
        %v446 = vlaneseq
        %v447 = vshrl.u32 %v446, 7
        %v448 = vsub.s32 %v445, %v447
        %v449 = vrot.slane %v442, %v448
        %450 = vst.msk [vmem:[%s286] sm:$0x3] %vm310, %v449
        %vm451 = vcmp.eq.s32.totalorder %v412, %v425
        %vm452 = vcmp.eq.s32.totalorder %v412, %v434
        %v453 = vsel %vm451, 1, 0
        %v454 = vsel %vm452, 1, 0
        %v455 = vcvt.s32.f32 %v453
        %v456 = vcvt.s32.f32 %v454
        %v457 = vld [vmem:[%s2] sm:$0xf]
        %vm458 = vcmask 64512
        %v460 = vsel %vm458, %v457, 0
        %462 = vmatprep.subr.mxu0 %v456
        %463 = vmatpush1.msra.mxu0 %v455
        %464 = vmatprep.subr.mxu0 0.0
        %465 = vmatpush1.msra.mxu0 0.0
        %466 = vmatprep.subr.mxu0 0.0
        %467 = vmatpush1.msra.mxu0 0.0
        %468 = vmatprep.subr.mxu0 0.0
        %469 = vmatpush1.msra.mxu0 0.0
        %470 = vmatprep.subr.mxu0 0.0
        %471 = vmatpush1.msra.mxu0 0.0
        %472 = vmatprep.subr.mxu0 0.0
        %473 = vmatpush1.msra.mxu0 0.0
        %474 = vmatprep.subr.mxu0 0.0
        %475 = vmatpush1.msra.mxu0 0.0
        %476 = vmatprep.subr.mxu0 0.0
        %477 = vmatpush1.msra.mxu0 0.0
        %478 = vmatprep.subr.mxu0 0.0
        %479 = vmatpush1.msra.mxu0 0.0
        %480 = vmatprep.subr.mxu0 0.0
        %481 = vmatpush1.msra.mxu0 0.0
        %482 = vmatprep.subr.mxu0 0.0
        %483 = vmatpush1.msra.mxu0 0.0
        %484 = vmatprep.subr.mxu0 0.0
        %485 = vmatpush1.msra.mxu0 0.0
        %486 = vmatprep.subr.mxu0 0.0
        %487 = vmatpush1.msra.mxu0 0.0
        %488 = vmatprep.subr.mxu0 0.0
        %489 = vmatpush1.msra.mxu0 0.0
        %490 = vmatprep.subr.mxu0 0.0
        %491 = vmatpush1.msra.mxu0 0.0
        %492 = vmatprep.subr.mxu0 0.0
        %493 = vmatpush1.msra.mxu0 0.0
        %494 = vmatprep.subr.mxu0 0.0
        %495 = vmatpush1.msra.mxu0 0.0
        %496 = vmatprep.subr.mxu0 0.0
        %497 = vmatpush1.msra.mxu0 0.0
        %498 = vmatprep.subr.mxu0 0.0
        %499 = vmatpush1.msra.mxu0 0.0
        %500 = vmatprep.subr.mxu0 0.0
        %501 = vmatpush1.msra.mxu0 0.0
        %502 = vmatprep.subr.mxu0 0.0
        %503 = vmatpush1.msra.mxu0 0.0
        %504 = vmatprep.subr.mxu0 0.0
        %505 = vmatpush1.msra.mxu0 0.0
        %506 = vmatprep.subr.mxu0 0.0
        %507 = vmatpush1.msra.mxu0 0.0
        %508 = vmatprep.subr.mxu0 0.0
        %509 = vmatpush1.msra.mxu0 0.0
        %510 = vmatprep.subr.mxu0 0.0
        %511 = vmatpush1.msra.mxu0 0.0
        %512 = vmatprep.subr.mxu0 0.0
        %513 = vmatpush1.msra.mxu0 0.0
        %514 = vmatprep.subr.mxu0 0.0
        %515 = vmatpush1.msra.mxu0 0.0
        %516 = vmatprep.subr.mxu0 0.0
        %517 = vmatpush1.msra.mxu0 0.0
        %518 = vmatprep.subr.mxu0 0.0
        %519 = vmatpush1.msra.mxu0 0.0
        %520 = vmatprep.subr.mxu0 0.0
        %521 = vmatpush1.msra.mxu0 0.0
        %522 = vmatprep.subr.mxu0 0.0
        %523 = vmatpush1.msra.mxu0 0.0
        %524 = vmatprep.subr.mxu0 0.0
        %525 = vmatpush1.msra.mxu0 0.0
        %526 = vmatprep.mubr.f32.mxu0 0.0
        %527 = vmatmul.mubr.f32.gmra.mrb[0].mxu0 %v460
        %v528 = vpop.f32.mrb[0].mxu0
        %v529 = vadd.f32 0.0, %v528
        %v530 = vpop.f32.mrb[0].mxu0
        %v531 = vadd.f32 0.0, %v530
        %532 = vdwg.mxu0
        %v535 = vcombine.low %v529, %v531
        %537 = vst [vmem:[%s279] sm:$0xff] %v535
        %v538 = vmul.f32 %v301, %v301
        %v540 = vcombine.high %v538, %v538
        %vm542 = vcmask 1043456
        %v543 = vsel %vm542, %v538, 0.0
        %v544 = vsel %vm542, %v540, 0.0
        %v545 = vadd.f32 %v543, %v544
        %546 = vadd.xlane.f32.xlu0 %v545
        %v547 = vpop.xlane.xlu0 %546
        %v548 = vrot.slane %v547, 4
        %v549 = vadd.f32 %v547, %v548
        %v550 = vrot.slane %v549, 2
        %v551 = vadd.f32 %v549, %v550
        %v552 = vrot.slane %v551, 1
        %v553 = vadd.f32 %v551, %v552
        %s554 = vtos %v553
        %v555 = vstv %s554
        %vm556 = vcmask 1040384
        %v557 = vsel %vm556, %v404, 0.0
        %v558 = vsel %vm556, %v410, 0.0
        %v559 = vadd.f32 %v557, %v558
        %560 = vadd.xlane.f32.xlu0 %v559
        %v561 = vpop.xlane.xlu0 %560
        %v562 = vrot.slane %v561, 4
        %v563 = vadd.f32 %v561, %v562
        %v564 = vrot.slane %v563, 2
        %v565 = vadd.f32 %v563, %v564
        %v566 = vrot.slane %v565, 1
        %v567 = vadd.f32 %v565, %v566
        %s568 = vtos %v567
        %v569 = vstv %s568
        %v570 = vadd.f32 %v555, %v569
        %vm571 = vcmask 0
        %572 = vst.msk [vmem:[%s299] sm:$0x1] %vm571, %v570
        %s573 = sand.u32 %s119, 1
        %s574 = scalar_lea.sflag [#allocation5], %s573
        %s575 = sand.u32 %s119, 1
        %s576 = smul.addr %s575, 8
        %s577 = scalar_lea.vmem [#allocation8], %s576
        %s578 = sand.u32 %s147, 1
        %s579 = scalar_lea.sflag [#allocation10], %s578
        %s580 = sand.u32 %s147, 1
        %s581 = smul.addr %s580, 2
        %s582 = scalar_lea.vmem [#allocation9], %s581
        %s583 = sadd.s32 %s31, %s32
        %p584 = scmp.lt.s32.totalorder %s583, 1
        %s585 = scalar_select %p584, %s583, 1
        %s586 = scalar_lea.vmem %s5, %s585
        // Predicated region
        $region41: #{tpu_custom_call.1} parent=31 // pred_check
          %p587 = pneg %p129
        $region42: #{tpu_custom_call.1} parent=31 // pred_check_branch
          %589 = sbr.rel (%p587) target = $region44
        $region43: #{tpu_custom_call.1} parent=31 // pred_region
          %s590 = smul.u32 2, %s32
          %s592 = ssub.s32 128, 128
          %593 = vsyncadd %s574, %s592
          %s594 = smul.addr %s31, 2
          %s595 = sadd.s32 %s590, %s594
          %s596 = smul.addr %s595, 64
          %s597 = scalar_lea.hbm %s3, %s596
          %s599 = sshll.u32 %s577, 4
          %s600 = int_to_ptr.vmem [resolvable:$true] %s599
          %602 = dma.vmem_to_hbm [thread:$0]  %s600, 128, %s597, %s574
        $region44: #{tpu_custom_call.1} parent=31 // pred_fallthru
          _
        // Predicated region
        $region45: #{tpu_custom_call.1} parent=31 // pred_check
          %p603 = pneg %p157
        $region46: #{tpu_custom_call.1} parent=31 // pred_check_branch
          %605 = sbr.rel (%p603) target = $region48
        $region47: #{tpu_custom_call.1} parent=31 // pred_region
          %s606 = smul.u32 2, %s32
          %s608 = ssub.s32 32, 32
          %609 = vsyncadd %s579, %s608
          %s610 = smul.addr %s31, 2
          %s611 = sadd.s32 %s606, %s610
          %s612 = smul.addr %s611, 16
          %s613 = scalar_lea.hbm %s4, %s612
          %s615 = sshll.u32 %s582, 4
          %s616 = int_to_ptr.vmem [resolvable:$true] %s615
          %618 = dma.vmem_to_hbm [thread:$0]  %s616, 32, %s613, %s579
        $region48: #{tpu_custom_call.1} parent=31 // pred_fallthru
          _
        // Predicated region
        $region49: #{tpu_custom_call.1} parent=31 // pred_check
          %p619 = pneg %p185
        $region50: #{tpu_custom_call.1} parent=31 // pred_check_branch
          %621 = sbr.rel (%p619) target = $region52
        $region51: #{tpu_custom_call.1} parent=31 // pred_region
          %s622 = sadd.s32 %s31, %s32
        $region52: #{tpu_custom_call.1} parent=31 // pred_fallthru
          _
      $region32: #{tpu_custom_call.1} parent=5 // pred_fallthru
        _
      %p623 = scmp.le.s32.totalorder 2, %s22
      // Predicated region
      $region53: #{tpu_custom_call.1} parent=5 // pred_check
        %p624 = pneg %p623
      $region54: #{tpu_custom_call.1} parent=5 // pred_check_branch
        %626 = sbr.rel (%p624) target = $region56
      $region55: #{tpu_custom_call.1} parent=5 // pred_region
        %s627 = ssub.s32 %s22, 2
        // Predicated region
        $region57: #{tpu_custom_call.1} parent=55 // pred_check
          %p628 = pneg %p135
        $region58: #{tpu_custom_call.1} parent=55 // pred_check_branch
          %630 = sbr.rel (%p628) target = $region60
        $region59: #{tpu_custom_call.1} parent=55 // pred_region
          %s631 = sand.u32 %s120, 1
          %s632 = scalar_lea.sflag [#allocation5], %s631
          %s633 = sand.u32 %s120, 1
          %s634 = smul.addr %s633, 8
          %s635 = scalar_lea.vmem [#allocation8], %s634
          %636 = dma.done %s632, 128
        $region60: #{tpu_custom_call.1} parent=55 // pred_fallthru
          _
        // Predicated region
        $region61: #{tpu_custom_call.1} parent=55 // pred_check
          %p637 = pneg %p163
        $region62: #{tpu_custom_call.1} parent=55 // pred_check_branch
          %639 = sbr.rel (%p637) target = $region64
        $region63: #{tpu_custom_call.1} parent=55 // pred_region
          %s640 = sand.u32 %s148, 1
          %s641 = scalar_lea.sflag [#allocation10], %s640
          %s642 = sand.u32 %s148, 1
          %s643 = smul.addr %s642, 2
          %s644 = scalar_lea.vmem [#allocation9], %s643
          %645 = dma.done %s641, 32
        $region64: #{tpu_custom_call.1} parent=55 // pred_fallthru
          _
        // Predicated region
        $region65: #{tpu_custom_call.1} parent=55 // pred_check
          %p646 = pneg %p191
        $region66: #{tpu_custom_call.1} parent=55 // pred_check_branch
          %648 = sbr.rel (%p646) target = $region68
        $region67: #{tpu_custom_call.1} parent=55 // pred_region
          %s649 = sadd.s32 %s33, %s34
          %p650 = scmp.lt.s32.totalorder %s649, 1
          %s651 = scalar_select %p650, %s649, 1
          %s652 = scalar_lea.vmem %s5, %s651
        $region68: #{tpu_custom_call.1} parent=55 // pred_fallthru
          _
      $region56: #{tpu_custom_call.1} parent=5 // pred_fallthru
        _
    $region6: #{tpu_custom_call.1} parent=1 // loop_footer
      %s26 = sadd.s32 1, %s22
    $region7: #{tpu_custom_call.1} parent=1 // loop_footer_branch
      %21 = sbr.rel target = $region3
    $region8: #{tpu_custom_call.1} parent=1 // loop_exit
      _
    %653 = vsyncpa [#allocation4], 1
    %s654 = scalar_lea.sflag [#allocation4], 1
    %655 = vsyncpa %s654, 1
    %656 = vsyncpa [#allocation7], 1
    %657 = vsyncpa [#allocation5], 1
    %s658 = scalar_lea.sflag [#allocation5], 1
    %659 = vsyncpa %s658, 1
    %660 = vsyncpa [#allocation10], 1
    %s661 = scalar_lea.sflag [#allocation10], 1
    %662 = vsyncpa %s661, 1

</llo_original>
